<compile_context>
chip_gen: v5e
topology: v5e:2x2
jax: 0.10.0
libtpu: 0.0.40
codegen_flags: <defaults>
</compile_context>

<pallas_src>
import functools

import jax
import jax.numpy as jnp
from jax import lax
from jax.experimental import pallas as pl
from jax.experimental.pallas import tpu as pltpu

POWER = 2  # module default: Normalize(power=2)


def _round_up(n, m):
    return ((n + m - 1) // m) * m


def _make_kernel(power):
    def kernel(x_ref, o_ref):
        x = x_ref[...]
        xf = x.astype(jnp.float32)
        if power == 2:
            # sum of squares in f32, then rsqrt on the EUP slot (no divide).
            ssq = jnp.sum(xf * xf, axis=-1, keepdims=True)
            inv = lax.rsqrt(ssq)
        else:
            # General p: matches torch x.pow(p) semantics (no abs).
            norm = jnp.sum(xf ** power, axis=-1, keepdims=True) ** (1.0 / power)
            inv = pl.reciprocal(norm, approx=False)
        # Multiply in the native dtype: avoids materializing a second full
        # f32 copy of the tile (helps bf16 on v5e's single store slot).
        o_ref[...] = (x * inv.astype(x.dtype)).astype(o_ref.dtype)

    return kernel


@functools.partial(jax.jit, static_argnames=("tile_n", "power"))
def normalize(x, *, tile_n=None, power=POWER):
    """L-p normalize along the feature (last) axis. x: (N, D)."""
    N, D = x.shape
    itemsize = jnp.dtype(x.dtype).itemsize
    sublane = max(8, 32 // itemsize)  # 8 f32, 16 bf16, 32 int8/fp8

    # Lane-dense feature axis: pad D to a multiple of 128 with zeros
    # (zeros contribute nothing to the p-norm, so results are unchanged).
    D_pad = _round_up(D, 128)

    # Row tile ~2 MiB per block (HBM-bandwidth-bound kernel: big tiles amortize
    # the ~0.35 us per-grid-step overhead), rounded to the sublane multiple.
    if tile_n is None:
        target_bytes = 2 << 20
        tile_n = max(sublane, target_bytes // max(D_pad * itemsize, 1))
    tile_n = max(sublane, (int(tile_n) // sublane) * sublane)
    tile_n = min(tile_n, _round_up(N, sublane))

    # Pad rows so the grid divides exactly (padded rows normalize
    # independently and are sliced off; no masked partial stores).
    N_pad = _round_up(N, tile_n)
    if (N_pad, D_pad) != (N, D):
        x = jnp.pad(x, ((0, N_pad - N), (0, D_pad - D)))

    grid = (N_pad // tile_n,)

    # Working set: in + out, double-buffered each. Only raise the scoped VMEM
    # limit if a (user-requested) large tile needs it; cap for v7x (64 MiB).
    block_bytes = tile_n * D_pad * itemsize
    needed = 4 * block_bytes + (2 << 20)
    vmem_limit = None if needed <= (16 << 20) else min(needed, 48 << 20)

    out = pl.pallas_call(
        _make_kernel(power),
        out_shape=jax.ShapeDtypeStruct((N_pad, D_pad), x.dtype),
        grid_spec=pltpu.PrefetchScalarGridSpec(
            num_scalar_prefetch=0,
            grid=grid,
            in_specs=[pl.BlockSpec((tile_n, D_pad), lambda i: (i, 0))],
            out_specs=pl.BlockSpec((tile_n, D_pad), lambda i: (i, 0)),
        ),
        compiler_params=pltpu.CompilerParams(
            dimension_semantics=("parallel",),  # shards across v7x's 2 TCs
            vmem_limit_bytes=vmem_limit,
        ),
    )(x)

    if (N_pad, D_pad) != (N, D):
        out = out[:N, :D]
    return out


def normalize_ref(x, power=POWER):
    xf = x.astype(jnp.float32)
    norm = jnp.sum(xf ** power, axis=1, keepdims=True) ** (1.0 / power)
    return (x / norm.astype(x.dtype)).astype(x.dtype)


if __name__ == "__main__":
    key = jax.random.PRNGKey(0)

    # Case 1: small aligned shape (batch of feature vectors, like the module).
    N, D = 16, 128
    x = jax.random.normal(key, (N, D), dtype=jnp.float32)
    out = jax.block_until_ready(normalize(x))
    ref = normalize_ref(x)
    assert out.shape == (N, D) and out.dtype == x.dtype
    assert jnp.allclose(out, ref, atol=1e-5, rtol=1e-5)

    # Case 2: unaligned shape exercises the row/feature padding path.
    N2, D2 = 13, 200
    x2 = jax.random.normal(jax.random.PRNGKey(1), (N2, D2), dtype=jnp.float32)
    out2 = jax.block_until_ready(normalize(x2))
    ref2 = normalize_ref(x2)
    assert out2.shape == (N2, D2) and out2.dtype == x2.dtype
    assert jnp.allclose(out2, ref2, atol=1e-5, rtol=1e-5)

    # TODO(synk): like the original module, there is no epsilon / zero-norm
    # guard, so an all-zero row yields Inf/NaN (matches torch semantics).
    print("KERNEL_OK")
</pallas_src>

<mosaic_0001>
module attributes {stable_mosaic.version = 11 : i64} {
  func.func @kernel(%arg0: i32, %arg1: memref<16x128xf32, #tpu.memory_space<vmem>>, %arg2: memref<16x128xf32, #tpu.memory_space<vmem>>) attributes {dimension_semantics = [#tpu.dimension_semantics<parallel>], iteration_bounds = array<i64: 1>, scalar_prefetch = 0 : i64, scratch_operands = 0 : i64, tpu.core_type = #tpu.core_type<tc>, window_params = [{transform_indices = @transform_0, window_bounds = array<i64: 16, 128>}, {transform_indices = @transform_1, window_bounds = array<i64: 16, 128>}]} {
    %c0 = arith.constant 0 : index
    %c0_0 = arith.constant 0 : index
    %0 = vector.load %arg1[%c0, %c0_0] : memref<16x128xf32, #tpu.memory_space<vmem>>, vector<16x128xf32>
    %1 = arith.mulf %0, %0 : vector<16x128xf32>
    %cst = arith.constant dense<0.000000e+00> : vector<16xf32>
    %2 = vector.multi_reduction <add>, %1, %cst [1] : vector<16x128xf32> to vector<16xf32>
    %3 = vector.shape_cast %2 : vector<16xf32> to vector<16x1xf32>
    %4 = math.rsqrt %3 : vector<16x1xf32>
    %5 = vector.broadcast %4 : vector<16x1xf32> to vector<16x128xf32>
    %6 = arith.mulf %0, %5 : vector<16x128xf32>
    %c0_1 = arith.constant 0 : index
    %c0_2 = arith.constant 0 : index
    %7 = vector.load %arg2[%c0_1, %c0_2] : memref<16x128xf32, #tpu.memory_space<vmem>>, vector<16x128xf32>
    tpu.vector_store %arg2[%c0_1, %c0_2], %6 {strides = array<i32>} : memref<16x128xf32, #tpu.memory_space<vmem>>, vector<16x128xf32>,
    return
  }
  func.func @transform_0(%arg0: i32) -> (i32, i32) {
    %c0_i32 = arith.constant 0 : i32
    %c0_i32_0 = arith.constant 0 : i32
    return %arg0, %c0_i32 : i32, i32
  }
  func.func @transform_1(%arg0: i32) -> (i32, i32) {
    %c0_i32 = arith.constant 0 : i32
    %c0_i32_0 = arith.constant 0 : i32
    return %arg0, %c0_i32 : i32, i32
  }
}

</mosaic_0001>

<llo_original>
// kernel: normalize.1
$region0: #{normalize.1}
  #allocation0 [shape = 'u32[]', space=smem, size = 0x4, offset = 0x4, fixed_abs, tag = 'smem constant byte address 0x4 - core index']
  #allocation1 [shape = 'u32[72,128]{1,0:T(1,128)}', space=vmem, size = 0x9000, scoped, tag = 'internal scratch']
  %s0 = inlined_call_operand.hbm [shape: f32[16,128], index: 0, kind: input, shape index: {}]
  %s1 = inlined_call_operand.hbm [shape: f32[16,128], index: 1, kind: output, shape index: {}]
  %s2 = sld [smem:[#allocation0]]
  $region18: #{normalize.1} parent=0
    _
  %s4 = ssub.s32 1, %s2
  %s5 = scalar_select 0, %s4, %s2
  $region1: #{normalize.1} parent=0
    #allocation2 [shape = 'u8[8192]{0}', space=vmem, size = 0x2000, scoped, tag = 'input window, operand 0, single buffered']
    #allocation3 [shape = 's32[1]{0}', space=sflag, size = 0x4, scoped, tag = 'scoped memory for normalize.1']
    #allocation4 [shape = 's32[1]{0}', space=sflag, size = 0x4, scoped, tag = 'scoped memory for normalize.1']
    #allocation5 [shape = 'u8[8192]{0}', space=vmem, size = 0x2000, scoped, tag = 'output window, operand 0, single buffered']
    %6 = vsyncpa [#allocation3], 0
    %7 = vsyncpa [#allocation4], 0
    // Predicated region
    $region2: #{normalize.1} parent=1 // pred_check
      _
    $region3: #{normalize.1} parent=1 // pred_check_branch
      %9 = sbr.rel (0) target = $region5
    $region4: #{normalize.1} parent=1 // pred_region
      %11 = vsyncadd [#allocation3], 0
      %s12 = sshll.u32 %s0, 4
      %s13 = int_to_ptr.hbm [resolvable:$true] %s12
      %s14 = sshll.u32 [#allocation2], 4
      %s15 = int_to_ptr.vmem [resolvable:$true] %s14
      %20 = dma.hbm_to_vmem [thread:$0]  %s13, 256, %s15, [#allocation3], 128, 128, 8
    $region5: #{normalize.1} parent=1 // pred_fallthru
      _
    // Predicated region
    $region6: #{normalize.1} parent=1 // pred_check
      _
    $region7: #{normalize.1} parent=1 // pred_check_branch
      %22 = sbr.rel (0) target = $region9
    $region8: #{normalize.1} parent=1 // pred_region
      %24 = dma.done [#allocation3], 256
    $region9: #{normalize.1} parent=1 // pred_fallthru
      _
    %v25 = vld [vmem:[#allocation2] sm:$0xff]
    %v26 = vld [vmem:[#allocation2 + $0x8] sm:$0xff]
    %v27 = vmul.f32 %v25, %v25
    %v28 = vmul.f32 %v26, %v26
    %29 = vadd.xlane.f32.xlu0 %v27
    %v30 = vpop.xlane.xlu0 %29
    %31 = vadd.xlane.f32.xlu0 %v28
    %v32 = vpop.xlane.xlu0 %31
    %v33 = vrsqrt.pop %v30
    %v34 = vmul.f32 %v33, %v30
    %v35 = vmul.f32 %v34, %v33
    %v36 = vmul.f32 0.5, %v35
    %v37 = vsub.f32 1.5, %v36
    %v38 = vmul.f32 %v33, %v37
    %vm39 = vweird.f32 %v30
    %vm40 = vweird.f32 %v33
    %vm41 = vmor %vm39, %vm40
    %v42 = vsel %vm41, %v33, %v38
    %v43 = vrsqrt.pop %v32
    %v44 = vmul.f32 %v43, %v32
    %v45 = vmul.f32 %v44, %v43
    %v46 = vmul.f32 0.5, %v45
    %v47 = vsub.f32 1.5, %v46
    %v48 = vmul.f32 %v43, %v47
    %vm49 = vweird.f32 %v32
    %vm50 = vweird.f32 %v43
    %vm51 = vmor %vm49, %vm50
    %v52 = vsel %vm51, %v43, %v48
    %v53 = vmul.f32 %v25, %v42
    %v54 = vmul.f32 %v26, %v52
    %55 = vst [vmem:[#allocation5] sm:$0xff] %v53
    %56 = vst [vmem:[#allocation5 + $0x8] sm:$0xff] %v54
    // Predicated region
    $region10: #{normalize.1} parent=1 // pred_check
      _
    $region11: #{normalize.1} parent=1 // pred_check_branch
      %58 = sbr.rel (0) target = $region13
    $region12: #{normalize.1} parent=1 // pred_region
      %60 = vsyncadd [#allocation4], 0
      %s61 = sshll.u32 [#allocation5], 4
      %s62 = int_to_ptr.vmem [resolvable:$true] %s61
      %s63 = sshll.u32 %s1, 4
      %s64 = int_to_ptr.hbm [resolvable:$true] %s63
      %69 = dma.vmem_to_hbm [thread:$0]  %s62, 256, %s64, [#allocation4], 128, 128, 8
    $region13: #{normalize.1} parent=1 // pred_fallthru
      _
    // Predicated region
    $region14: #{normalize.1} parent=1 // pred_check
      _
    $region15: #{normalize.1} parent=1 // pred_check_branch
      %71 = sbr.rel (0) target = $region17
    $region16: #{normalize.1} parent=1 // pred_region
      %73 = dma.done [#allocation4], 256
    $region17: #{normalize.1} parent=1 // pred_fallthru
      _
    %74 = vsyncpa [#allocation3], 1
    %75 = vsyncpa [#allocation4], 1

</llo_original>
